<compile_context>
chip_gen: v5e
topology: v5e:2x2
jax: 0.10.0
libtpu: 0.0.40
codegen_flags: <defaults>
</compile_context>

<pallas_src>
import functools

import jax
import jax.numpy as jnp
import numpy as np
from jax.experimental import pallas as pl
from jax.experimental.pallas import tpu as pltpu

H1 = 128      # fc1 width
H2 = 64       # fc2 width
OUT_W = 128   # lane-dense fused head width: [policy | value | zero pad]

# lane-aligned offsets of the bias segments inside the packed bias slab (f32)
_B1_OFF = 0
_B2_OFF = 128
_BH_OFF = 256
_BIAS_SLAB = _BH_OFF + OUT_W   # 384 lanes


def trading_nn_kernel(x_ref, w1_ref, w2_ref, wh_ref, b_ref, out_ref, *,
                      action_size):
    # static, lane-aligned slices of the packed bias slab (f32)
    b1 = b_ref[:, _B1_OFF:_B1_OFF + H1]
    b2 = b_ref[:, _B2_OFF:_B2_OFF + H2]
    bh = b_ref[:, _BH_OFF:_BH_OFF + OUT_W]

    # fc1 + ReLU  (bf16 MXU operands, f32 accumulation, f32 elementwise)
    x = x_ref[...]
    if x.dtype != jnp.bfloat16:
        x = x.astype(jnp.bfloat16)
    h1 = jnp.dot(x, w1_ref[...], preferred_element_type=jnp.float32) + b1
    h1 = jnp.maximum(h1, 0.0)

    # fc2 + ReLU
    h2 = jnp.dot(h1.astype(jnp.bfloat16), w2_ref[...],
                 preferred_element_type=jnp.float32) + b2
    h2 = jnp.maximum(h2, 0.0)

    # fused, lane-dense head: one matmul -> cols [0:A) policy logits,
    # col A value pre-activation, cols (A:128) exactly zero (zero-padded
    # weights + zero-padded bias).
    hz = jnp.dot(h2.astype(jnp.bfloat16), wh_ref[...],
                 preferred_element_type=jnp.float32) + bh

    col = jax.lax.broadcasted_iota(jnp.int32, hz.shape, 1)
    is_policy = col < action_size

    # stable softmax over the policy columns only (other columns masked out)
    logits = jnp.where(is_policy, hz, jnp.float32(-1e30))
    m = jnp.max(logits, axis=-1, keepdims=True)
    e = jnp.exp(logits - m)                           # masked cols -> 0
    denom = jnp.sum(e, axis=-1, keepdims=True)
    policy = e * pl.reciprocal(denom, approx=True)    # EUP slot, frees VALU

    # single unmasked 128-lane store: policy in [0:A), tanh(value) in col A,
    # tanh(0) = 0 in the padded columns.
    out_ref[...] = jnp.where(is_policy, policy, jnp.tanh(hz)).astype(out_ref.dtype)


def pack_params(params, action_size):
    """Fuse + zero-pad the heads to 128 lanes, pack biases into one slab."""
    w1, b1, w2, b2, wp, bp, wv, bv = params
    a1 = action_size + 1
    assert a1 <= OUT_W, f"action_size + 1 = {a1} must be <= {OUT_W}"

    wh = jnp.zeros((H2, OUT_W), jnp.float32)
    wh = wh.at[:, :action_size].set(wp)
    wh = wh.at[:, action_size:a1].set(wv)

    bias = jnp.zeros((1, _BIAS_SLAB), jnp.float32)
    bias = bias.at[:, _B1_OFF:_B1_OFF + H1].set(b1)
    bias = bias.at[:, _B2_OFF:_B2_OFF + H2].set(b2)
    bias = bias.at[:, _BH_OFF:_BH_OFF + action_size].set(bp)
    bias = bias.at[:, _BH_OFF + action_size:_BH_OFF + a1].set(bv)

    return (w1.astype(jnp.bfloat16),
            w2.astype(jnp.bfloat16),
            wh.astype(jnp.bfloat16),
            bias)


def _round_up(n, m):
    return ((n + m - 1) // m) * m


def _choose_tiles(batch, tile_batch, min_split_batch=256):
    """Fewest, fattest tiles; >=2 balanced tiles for larger batches (v7x 2 TCs)."""
    tiles = pl.cdiv(batch, tile_batch)
    if batch >= min_split_batch:
        tiles = max(tiles, 2)
    if tiles > 1 and tiles % 2:
        tiles += 1                    # even number of balanced tiles for megacore
    tb = batch if tiles == 1 else _round_up(pl.cdiv(batch, tiles), 8)
    return tiles, tb


def _vmem_limit_bytes(tb, input_size):
    """Per-tile footprint estimate -> scoped-VMEM limit (clamped 32..48 MiB)."""
    x_blk = tb * input_size * 4
    out_blk = tb * OUT_W * 4
    w_blk = (input_size * H1 + H1 * H2 + H2 * OUT_W) * 2 + _BIAS_SLAB * 4
    interm = tb * (H1 + H2 + 4 * OUT_W) * 4        # h1, h2, hz/e/policy/logits
    need = 2 * (x_blk + out_blk + w_blk) + interm  # double-buffered blocks
    return int(min(max(2 * need, 32 * 2**20), 48 * 2**20))


def trading_nn_forward(x, packed, action_size, *, tile_batch=1024):
    w1, w2, wh, bias = packed
    batch, input_size = x.shape

    num_tiles, tb = _choose_tiles(batch, tile_batch)
    padded = num_tiles * tb
    x_p = jnp.pad(x, ((0, padded - batch), (0, 0))) if padded != batch else x

    kernel = functools.partial(trading_nn_kernel, action_size=action_size)

    out = pl.pallas_call(
        kernel,
        out_shape=jax.ShapeDtypeStruct((padded, OUT_W), jnp.float32),
        grid=(num_tiles,),
        in_specs=[
            # activations: tiled over batch
            pl.BlockSpec((tb, input_size), lambda i: (i, 0)),
            # weights / packed bias: VMEM-resident across all grid steps
            pl.BlockSpec((input_size, H1), lambda i: (0, 0)),
            pl.BlockSpec((H1, H2), lambda i: (0, 0)),
            pl.BlockSpec((H2, OUT_W), lambda i: (0, 0)),
            pl.BlockSpec((1, _BIAS_SLAB), lambda i: (0, 0)),
        ],
        out_specs=pl.BlockSpec((tb, OUT_W), lambda i: (i, 0)),
        compiler_params=pltpu.CompilerParams(
            dimension_semantics=("parallel",),          # shard tiles across TCs
            vmem_limit_bytes=_vmem_limit_bytes(tb, input_size)),
    )(x_p, w1, w2, wh, bias)

    return out[:batch, :action_size], out[:batch, action_size:action_size + 1]


def init_params(key, input_size, action_size):
    """PyTorch nn.Linear-style init (uniform +/- 1/sqrt(fan_in)), f32.

    Weights returned pre-transposed to [in, out]; biases as [1, out].
    """
    def linear(key, fan_in, fan_out):
        kw, kb = jax.random.split(key)
        bound = 1.0 / np.sqrt(fan_in)
        w = jax.random.uniform(kw, (fan_in, fan_out), jnp.float32, -bound, bound)
        b = jax.random.uniform(kb, (1, fan_out), jnp.float32, -bound, bound)
        return w, b

    k1, k2, k3, k4 = jax.random.split(key, 4)
    w1, b1 = linear(k1, input_size, H1)
    w2, b2 = linear(k2, H1, H2)
    wp, bp = linear(k3, H2, action_size)
    wv, bv = linear(k4, H2, 1)
    return (w1, b1, w2, b2, wp, bp, wv, bv)


def reference_forward(x, params):
    (w1, b1, w2, b2, wp, bp, wv, bv) = params
    h1 = jax.nn.relu(x @ w1 + b1)
    h2 = jax.nn.relu(h1 @ w2 + b2)
    policy = jax.nn.softmax(h2 @ wp + bp, axis=1)
    value = jnp.tanh(h2 @ wv + bv)
    return policy, value


if __name__ == "__main__":
    input_size = 32
    action_size = 8

    key = jax.random.PRNGKey(0)
    k_params, k_x1, k_x2 = jax.random.split(key, 3)
    params = init_params(k_params, input_size, action_size)
    packed = pack_params(params, action_size)

    # ---- small-shape check (batch=2, single full-array tile) ----
    x_small = jax.random.normal(k_x1, (2, input_size), jnp.float32)
    policy, value = trading_nn_forward(x_small, packed, action_size)
    jax.block_until_ready((policy, value))

    ref_p, ref_v = reference_forward(x_small, params)
    # tolerance loosened vs. f32 reference: bf16 MXU operands + approx reciprocal
    np.testing.assert_allclose(np.asarray(policy), np.asarray(ref_p),
                               rtol=5e-2, atol=1e-2)
    np.testing.assert_allclose(np.asarray(value), np.asarray(ref_v),
                               rtol=5e-2, atol=1e-2)
    assert policy.shape == (2, action_size)
    assert value.shape == (2, 1)

    # ---- batch-gridded path (padding + balanced multi-tile + resident weights) ----
    x_big = jax.random.normal(k_x2, (1000, input_size), jnp.float32)
    policy_b, value_b = trading_nn_forward(x_big, packed, action_size)
    jax.block_until_ready((policy_b, value_b))

    ref_pb, ref_vb = reference_forward(x_big, params)
    np.testing.assert_allclose(np.asarray(policy_b), np.asarray(ref_pb),
                               rtol=1e-1, atol=1e-2)
    np.testing.assert_allclose(np.asarray(value_b), np.asarray(ref_vb),
                               rtol=1e-1, atol=1e-2)
    np.testing.assert_allclose(np.asarray(policy_b).sum(axis=1), 1.0, atol=2e-2)
    assert policy_b.shape == (1000, action_size)
    assert value_b.shape == (1000, 1)

    print("KERNEL_OK")
</pallas_src>

<mosaic_0001>
module attributes {stable_mosaic.version = 11 : i64} {
  func.func @trading_nn_kernel(%arg0: i32, %arg1: memref<2x32xf32, #tpu.memory_space<vmem>>, %arg2: memref<32x128xbf16, #tpu.memory_space<vmem>>, %arg3: memref<128x64xbf16, #tpu.memory_space<vmem>>, %arg4: memref<64x128xbf16, #tpu.memory_space<vmem>>, %arg5: memref<1x384xf32, #tpu.memory_space<vmem>>, %arg6: memref<2x128xf32, #tpu.memory_space<vmem>>) attributes {dimension_semantics = [#tpu.dimension_semantics<parallel>], iteration_bounds = array<i64: 1>, scalar_prefetch = 0 : i64, scratch_operands = 0 : i64, tpu.core_type = #tpu.core_type<tc>, window_params = [{transform_indices = @transform_0, window_bounds = array<i64: 2, 32>}, {pipeline_mode = #tpu.pipeline_mode<synchronous>, transform_indices = @transform_1, window_bounds = array<i64: 32, 128>}, {pipeline_mode = #tpu.pipeline_mode<synchronous>, transform_indices = @transform_2, window_bounds = array<i64: 128, 64>}, {pipeline_mode = #tpu.pipeline_mode<synchronous>, transform_indices = @transform_3, window_bounds = array<i64: 64, 128>}, {pipeline_mode = #tpu.pipeline_mode<synchronous>, transform_indices = @transform_4, window_bounds = array<i64: 1, 384>}, {transform_indices = @transform_5, window_bounds = array<i64: 2, 128>}]} {
    %c0 = arith.constant 0 : index
    %c0_0 = arith.constant 0 : index
    %0 = vector.load %arg5[%c0, %c0_0] : memref<1x384xf32, #tpu.memory_space<vmem>>, vector<1x128xf32>
    %c0_1 = arith.constant 0 : index
    %c128 = arith.constant 128 : index
    %1 = vector.load %arg5[%c0_1, %c128] : memref<1x384xf32, #tpu.memory_space<vmem>>, vector<1x64xf32>
    %c0_2 = arith.constant 0 : index
    %c256 = arith.constant 256 : index
    %2 = vector.load %arg5[%c0_2, %c256] : memref<1x384xf32, #tpu.memory_space<vmem>>, vector<1x128xf32>
    %c0_3 = arith.constant 0 : index
    %c0_4 = arith.constant 0 : index
    %3 = vector.load %arg1[%c0_3, %c0_4] : memref<2x32xf32, #tpu.memory_space<vmem>>, vector<2x32xf32>
    %4 = arith.truncf %3 : vector<2x32xf32> to vector<2x32xbf16>
    %c0_5 = arith.constant 0 : index
    %c0_6 = arith.constant 0 : index
    %5 = vector.load %arg2[%c0_5, %c0_6] : memref<32x128xbf16, #tpu.memory_space<vmem>>, vector<32x128xbf16>
    %cst = arith.constant dense<0.000000e+00> : vector<2x128xf32>
    %6 = tpu.matmul %4, %5, %cst {dimension_numbers = #tpu.dot_dimension_numbers<[1], [0], [0], [1], [0, 0, 1, 1], [], []>} : vector<2x32xbf16>, vector<32x128xbf16>, vector<2x128xf32> -> vector<2x128xf32>
    %7 = vector.broadcast %0 : vector<1x128xf32> to vector<2x128xf32>
    %8 = arith.addf %6, %7 : vector<2x128xf32>
    %cst_7 = arith.constant 0.000000e+00 : f32
    %9 = vector.broadcast %cst_7 : f32 to vector<2x128xf32>
    %10 = arith.maximumf %8, %9 : vector<2x128xf32>
    %11 = arith.truncf %10 : vector<2x128xf32> to vector<2x128xbf16>
    %c0_8 = arith.constant 0 : index
    %c0_9 = arith.constant 0 : index
    %12 = vector.load %arg3[%c0_8, %c0_9] : memref<128x64xbf16, #tpu.memory_space<vmem>>, vector<128x64xbf16>
    %cst_10 = arith.constant dense<0.000000e+00> : vector<2x64xf32>
    %13 = tpu.matmul %11, %12, %cst_10 {dimension_numbers = #tpu.dot_dimension_numbers<[1], [0], [0], [1], [0, 0, 1, 1], [], []>} : vector<2x128xbf16>, vector<128x64xbf16>, vector<2x64xf32> -> vector<2x64xf32>
    %14 = vector.broadcast %1 : vector<1x64xf32> to vector<2x64xf32>
    %15 = arith.addf %13, %14 : vector<2x64xf32>
    %cst_11 = arith.constant 0.000000e+00 : f32
    %16 = vector.broadcast %cst_11 : f32 to vector<2x64xf32>
    %17 = arith.maximumf %15, %16 : vector<2x64xf32>
    %18 = arith.truncf %17 : vector<2x64xf32> to vector<2x64xbf16>
    %c0_12 = arith.constant 0 : index
    %c0_13 = arith.constant 0 : index
    %19 = vector.load %arg4[%c0_12, %c0_13] : memref<64x128xbf16, #tpu.memory_space<vmem>>, vector<64x128xbf16>
    %cst_14 = arith.constant dense<0.000000e+00> : vector<2x128xf32>
    %20 = tpu.matmul %18, %19, %cst_14 {dimension_numbers = #tpu.dot_dimension_numbers<[1], [0], [0], [1], [0, 0, 1, 1], [], []>} : vector<2x64xbf16>, vector<64x128xbf16>, vector<2x128xf32> -> vector<2x128xf32>
    %21 = vector.broadcast %2 : vector<1x128xf32> to vector<2x128xf32>
    %22 = arith.addf %20, %21 : vector<2x128xf32>
    %23 = tpu.iota {dimensions = array<i32: 1>} : vector<2x128xi32>
    %c8_i32 = arith.constant 8 : i32
    %24 = vector.broadcast %c8_i32 : i32 to vector<2x128xi32>
    %25 = arith.cmpi slt, %23, %24 : vector<2x128xi32>
    %cst_15 = arith.constant -1.000000e+30 : f32
    %26 = vector.broadcast %cst_15 : f32 to vector<2x128xf32>
    %27 = arith.select %25, %22, %26 : vector<2x128xi1>, vector<2x128xf32>
    %cst_16 = arith.constant dense<0xFF800000> : vector<2xf32>
    %28 = vector.multi_reduction <maximumf>, %27, %cst_16 [1] : vector<2x128xf32> to vector<2xf32>
    %29 = vector.shape_cast %28 : vector<2xf32> to vector<2x1xf32>
    %30 = vector.broadcast %29 : vector<2x1xf32> to vector<2x128xf32>
    %31 = arith.subf %27, %30 : vector<2x128xf32>
    %32 = math.exp %31 : vector<2x128xf32>
    %cst_17 = arith.constant dense<0.000000e+00> : vector<2xf32>
    %33 = vector.multi_reduction <add>, %32, %cst_17 [1] : vector<2x128xf32> to vector<2xf32>
    %34 = vector.shape_cast %33 : vector<2xf32> to vector<2x1xf32>
    %35 = tpu.reciprocal %34 {approx = true} : vector<2x1xf32> -> vector<2x1xf32>
    %36 = vector.broadcast %35 : vector<2x1xf32> to vector<2x128xf32>
    %37 = arith.mulf %32, %36 : vector<2x128xf32>
    %38 = math.tanh %22 : vector<2x128xf32>
    %39 = arith.select %25, %37, %38 : vector<2x128xi1>, vector<2x128xf32>
    %c0_18 = arith.constant 0 : index
    %c0_19 = arith.constant 0 : index
    %40 = vector.load %arg6[%c0_18, %c0_19] : memref<2x128xf32, #tpu.memory_space<vmem>>, vector<2x128xf32>
    tpu.vector_store %arg6[%c0_18, %c0_19], %39 {strides = array<i32>} : memref<2x128xf32, #tpu.memory_space<vmem>>, vector<2x128xf32>,
    return
  }
  func.func @transform_0(%arg0: i32) -> (i32, i32) {
    %c0_i32 = arith.constant 0 : i32
    %c0_i32_0 = arith.constant 0 : i32
    return %arg0, %c0_i32 : i32, i32
  }
  func.func @transform_1(%arg0: i32) -> (i32, i32) {
    %c0_i32 = arith.constant 0 : i32
    %c0_i32_0 = arith.constant 0 : i32
    %c0_i32_1 = arith.constant 0 : i32
    return %c0_i32, %c0_i32_0 : i32, i32
  }
  func.func @transform_2(%arg0: i32) -> (i32, i32) {
    %c0_i32 = arith.constant 0 : i32
    %c0_i32_0 = arith.constant 0 : i32
    %c0_i32_1 = arith.constant 0 : i32
    return %c0_i32, %c0_i32_0 : i32, i32
  }
  func.func @transform_3(%arg0: i32) -> (i32, i32) {
    %c0_i32 = arith.constant 0 : i32
    %c0_i32_0 = arith.constant 0 : i32
    %c0_i32_1 = arith.constant 0 : i32
    return %c0_i32, %c0_i32_0 : i32, i32
  }
  func.func @transform_4(%arg0: i32) -> (i32, i32) {
    %c0_i32 = arith.constant 0 : i32
    %c0_i32_0 = arith.constant 0 : i32
    %c0_i32_1 = arith.constant 0 : i32
    return %c0_i32, %c0_i32_0 : i32, i32
  }
  func.func @transform_5(%arg0: i32) -> (i32, i32) {
    %c0_i32 = arith.constant 0 : i32
    %c0_i32_0 = arith.constant 0 : i32
    return %arg0, %c0_i32 : i32, i32
  }
}

</mosaic_0001>

<llo_original>
// kernel: tpu_custom_call.1
$region0: #{tpu_custom_call.1}
  #allocation0 [shape = 'u32[]', space=smem, size = 0x4, offset = 0x4, fixed_abs, tag = 'smem constant byte address 0x4 - core index']
  #allocation1 [shape = 'u32[72,128]{1,0:T(1,128)}', space=vmem, size = 0x9000, scoped, tag = 'internal scratch']
  %s0 = inlined_call_operand.vmem [shape: f32[2,32], index: 0, kind: input, shape index: {}]
  %s1 = inlined_call_operand.vmem [shape: bf16[32,128], index: 1, kind: input, shape index: {}]
  %s2 = inlined_call_operand.vmem [shape: bf16[128,64], index: 2, kind: input, shape index: {}]
  %s3 = inlined_call_operand.vmem [shape: bf16[64,128], index: 3, kind: input, shape index: {}]
  %s4 = inlined_call_operand.vmem [shape: f32[1,384], index: 4, kind: input, shape index: {}]
  %s5 = inlined_call_operand.hbm [shape: f32[2,128], index: 5, kind: output, shape index: {}]
  %s6 = sld [smem:[#allocation0]]
  $region30: #{tpu_custom_call.1} parent=0
    _
  %s8 = ssub.s32 1, %s6
  %s9 = scalar_select 0, %s8, %s6
  $region1: #{tpu_custom_call.1} parent=0
    #allocation2 [shape = 'u8[1024]{0}', space=vmem, size = 0x400, scoped, tag = 'output window, operand 0, single buffered']
    #allocation3 [shape = 's32[1]{0}', space=sflag, size = 0x4, scoped, tag = 'scoped memory for tpu_custom_call.1']
    %10 = vsyncpa [#allocation3], 0
    // Predicated region
    $region2: #{tpu_custom_call.1} parent=1 // pred_check
      _
    $region3: #{tpu_custom_call.1} parent=1 // pred_check_branch
      %12 = sbr.rel (0) target = $region5
    $region4: #{tpu_custom_call.1} parent=1 // pred_region
      _
    $region5: #{tpu_custom_call.1} parent=1 // pred_fallthru
      _
    // Predicated region
    $region6: #{tpu_custom_call.1} parent=1 // pred_check
      _
    $region7: #{tpu_custom_call.1} parent=1 // pred_check_branch
      %14 = sbr.rel (0) target = $region9
    $region8: #{tpu_custom_call.1} parent=1 // pred_region
      _
    $region9: #{tpu_custom_call.1} parent=1 // pred_fallthru
      _
    // Predicated region
    $region10: #{tpu_custom_call.1} parent=1 // pred_check
      _
    $region11: #{tpu_custom_call.1} parent=1 // pred_check_branch
      %16 = sbr.rel (0) target = $region13
    $region12: #{tpu_custom_call.1} parent=1 // pred_region
      _
    $region13: #{tpu_custom_call.1} parent=1 // pred_fallthru
      _
    // Predicated region
    $region14: #{tpu_custom_call.1} parent=1 // pred_check
      _
    $region15: #{tpu_custom_call.1} parent=1 // pred_check_branch
      %18 = sbr.rel (0) target = $region17
    $region16: #{tpu_custom_call.1} parent=1 // pred_region
      _
    $region17: #{tpu_custom_call.1} parent=1 // pred_fallthru
      _
    // Predicated region
    $region18: #{tpu_custom_call.1} parent=1 // pred_check
      _
    $region19: #{tpu_custom_call.1} parent=1 // pred_check_branch
      %20 = sbr.rel (0) target = $region21
    $region20: #{tpu_custom_call.1} parent=1 // pred_region
      _
    $region21: #{tpu_custom_call.1} parent=1 // pred_fallthru
      _
    %v22 = vld [vmem:[%s4] sm:$0x1]
    %v23 = vld [vmem:[%s4 + $0x1] sm:$0x1]
    %v24 = vld [vmem:[%s4 + $0x2] sm:$0x1]
    %v25 = vld [vmem:[%s0] sm:$0x3]
    %v26 = vpack.c.bf16 %v25, %v25
    %v27 = vld [vmem:[%s1] sm:$0xf]
    %v28 = vld [vmem:[%s1 + $0x4] sm:$0xf]
    %v29 = vld [vmem:[%s1 + $0x8] sm:$0xf]
    %v30 = vld [vmem:[%s1 + $0xc] sm:$0xf]
    %v32 = vperm.slane %v22, 0
    %v38 = vunpack.c.l.b16 %v27
    %v39 = vunpack.c.l.b16 %v28
    %v40 = vunpack.c.l.b16 %v29
    %v41 = vunpack.c.l.b16 %v30
    %v42 = vpack.c.b16 %v39, %v38
    %v43 = vpack.c.b16 %v41, %v40
    %vm46 = vcmask 261120
    %v48 = vsel %vm46, %v26, 0
    %50 = vmatpush.bf16.msra.mxu0 0
    %51 = vmatpush.bf16.msra.mxu0 0
    %52 = vmatpush.bf16.msra.mxu0 0
    %53 = vmatpush.bf16.msra.mxu0 0
    %54 = vmatpush.bf16.msra.mxu0 0
    %55 = vmatpush.bf16.msra.mxu0 0
    %56 = vmatpush.bf16.msra.mxu0 %v43
    %57 = vmatpush.bf16.msra.mxu0 %v42
    %58 = vmatmul.bf16.gmra.mxu0 %v48
    %v59 = vpop.f32.mrf.mxu0
    %v60 = vadd.f32 %v32, %v59
    %v61 = vpop.f32.mrf.mxu0
    %62 = vdwg.mxu0
    %v63 = vmax.f32 %v60, 0.0
    %v64 = vpack.c.bf16 %v63, %v63
    %v65 = vld [vmem:[%s2] sm:$0xf]
    %v66 = vld [vmem:[%s2 + $0x4] sm:$0xf]
    %v67 = vld [vmem:[%s2 + $0x8] sm:$0xf]
    %v68 = vld [vmem:[%s2 + $0xc] sm:$0xf]
    %v69 = vld [vmem:[%s2 + $0x10] sm:$0xf]
    %v70 = vld [vmem:[%s2 + $0x14] sm:$0xf]
    %v71 = vld [vmem:[%s2 + $0x18] sm:$0xf]
    %v72 = vld [vmem:[%s2 + $0x1c] sm:$0xf]
    %v73 = vld [vmem:[%s2 + $0x20] sm:$0xf]
    %v74 = vld [vmem:[%s2 + $0x24] sm:$0xf]
    %v75 = vld [vmem:[%s2 + $0x28] sm:$0xf]
    %v76 = vld [vmem:[%s2 + $0x2c] sm:$0xf]
    %v77 = vld [vmem:[%s2 + $0x30] sm:$0xf]
    %v78 = vld [vmem:[%s2 + $0x34] sm:$0xf]
    %v79 = vld [vmem:[%s2 + $0x38] sm:$0xf]
    %v80 = vld [vmem:[%s2 + $0x3c] sm:$0xf]
    %v82 = vperm.slane %v23, 0
    %v100 = vunpack.c.l.b16 %v65
    %v101 = vunpack.c.l.b16 %v66
    %v102 = vunpack.c.l.b16 %v67
    %v103 = vunpack.c.l.b16 %v68
    %v104 = vunpack.c.l.b16 %v69
    %v105 = vunpack.c.l.b16 %v70
    %v106 = vunpack.c.l.b16 %v71
    %v107 = vunpack.c.l.b16 %v72
    %v108 = vunpack.c.l.b16 %v73
    %v109 = vunpack.c.l.b16 %v74
    %v110 = vunpack.c.l.b16 %v75
    %v111 = vunpack.c.l.b16 %v76
    %v112 = vunpack.c.l.b16 %v77
    %v113 = vunpack.c.l.b16 %v78
    %v114 = vunpack.c.l.b16 %v79
    %v115 = vunpack.c.l.b16 %v80
    %v116 = vpack.c.b16 %v101, %v100
    %v117 = vpack.c.b16 %v103, %v102
    %v118 = vpack.c.b16 %v105, %v104
    %v119 = vpack.c.b16 %v107, %v106
    %v120 = vpack.c.b16 %v109, %v108
    %v121 = vpack.c.b16 %v111, %v110
    %v122 = vpack.c.b16 %v113, %v112
    %v123 = vpack.c.b16 %v115, %v114
    %132 = vmatpush.bf16.msra.mxu0 %v123
    %133 = vmatpush.bf16.msra.mxu0 %v122
    %134 = vmatpush.bf16.msra.mxu0 %v121
    %135 = vmatpush.bf16.msra.mxu0 %v120
    %136 = vmatpush.bf16.msra.mxu0 %v119
    %137 = vmatpush.bf16.msra.mxu0 %v118
    %138 = vmatpush.bf16.msra.mxu0 %v117
    %139 = vmatpush.bf16.msra.mxu0 %v116
    %140 = vmatmul.bf16.gmra.mxu0 %v64
    %v141 = vpop.f32.mrf.mxu0
    %v142 = vadd.f32 %v82, %v141
    %v143 = vpop.f32.mrf.mxu0
    %144 = vdwg.mxu0
    %v145 = vmax.f32 %v142, 0.0
    %v146 = vpack.c.bf16 %v145, %v145
    %v147 = vld [vmem:[%s3] sm:$0xf]
    %v148 = vld [vmem:[%s3 + $0x4] sm:$0xf]
    %v149 = vld [vmem:[%s3 + $0x8] sm:$0xf]
    %v150 = vld [vmem:[%s3 + $0xc] sm:$0xf]
    %v151 = vld [vmem:[%s3 + $0x10] sm:$0xf]
    %v152 = vld [vmem:[%s3 + $0x14] sm:$0xf]
    %v153 = vld [vmem:[%s3 + $0x18] sm:$0xf]
    %v154 = vld [vmem:[%s3 + $0x1c] sm:$0xf]
    %v156 = vperm.slane %v24, 0
    %v166 = vunpack.c.l.b16 %v147
    %v167 = vunpack.c.l.b16 %v148
    %v168 = vunpack.c.l.b16 %v149
    %v169 = vunpack.c.l.b16 %v150
    %v170 = vunpack.c.l.b16 %v151
    %v171 = vunpack.c.l.b16 %v152
    %v172 = vunpack.c.l.b16 %v153
    %v173 = vunpack.c.l.b16 %v154
    %v174 = vpack.c.b16 %v167, %v166
    %v175 = vpack.c.b16 %v169, %v168
    %v176 = vpack.c.b16 %v171, %v170
    %v177 = vpack.c.b16 %v173, %v172
    %vm182 = vcmask 523264
    %v184 = vsel %vm182, %v146, 0
    %186 = vmatpush.bf16.msra.mxu0 0
    %187 = vmatpush.bf16.msra.mxu0 0
    %188 = vmatpush.bf16.msra.mxu0 0
    %189 = vmatpush.bf16.msra.mxu0 0
    %190 = vmatpush.bf16.msra.mxu0 %v177
    %191 = vmatpush.bf16.msra.mxu0 %v176
    %192 = vmatpush.bf16.msra.mxu0 %v175
    %193 = vmatpush.bf16.msra.mxu0 %v174
    %194 = vmatmul.bf16.gmra.mxu0 %v184
    %v195 = vpop.f32.mrf.mxu0
    %v196 = vadd.f32 %v156, %v195
    %v197 = vpop.f32.mrf.mxu0
    %198 = vdwg.mxu0
    %v199 = vlaneseq
    %v200 = vand.u32 %v199, 127
    %vm201 = vcmp.lt.s32.totalorder %v200, 8
    %v202 = vsel %vm201, %v196, -1e+30
    %vm203 = vcmask 1041408
    %v204 = vsel %vm203, %v202, -inf
    %205 = vmax.xlane.f32.xlu0 %v204
    %v206 = vpop.xlane.xlu0 %205
    %v207 = vsub.f32 %v202, %v206
    %v208 = vmul.f32 %v207, 1.442695
    %v209 = vpow.pop %v208
    %v210 = vsel %vm203, %v209, 0.0
    %211 = vadd.xlane.f32.xlu0 %v210
    %v212 = vpop.xlane.xlu0 %211
    %v213 = vrcp.pop %v212
    %v214 = vmul.f32 %v209, %v213
    %v215 = vtanh.pop %v196
    %v216 = vsel %vm201, %v214, %v215
    %217 = vst [vmem:[#allocation2] sm:$0x3] %v216
    // Predicated region
    $region22: #{tpu_custom_call.1} parent=1 // pred_check
      _
    $region23: #{tpu_custom_call.1} parent=1 // pred_check_branch
      %219 = sbr.rel (0) target = $region25
    $region24: #{tpu_custom_call.1} parent=1 // pred_region
      %221 = vsyncadd [#allocation3], 0
      %s223 = sshll.u32 [#allocation2], 4
      %s224 = int_to_ptr.vmem [resolvable:$true] %s223
      %s225 = sshll.u32 %s5, 4
      %s226 = int_to_ptr.hbm [resolvable:$true] %s225
      %228 = dma.vmem_to_hbm [thread:$0]  %s224, 32, %s226, [#allocation3]
    $region25: #{tpu_custom_call.1} parent=1 // pred_fallthru
      _
    // Predicated region
    $region26: #{tpu_custom_call.1} parent=1 // pred_check
      _
    $region27: #{tpu_custom_call.1} parent=1 // pred_check_branch
      %230 = sbr.rel (0) target = $region29
    $region28: #{tpu_custom_call.1} parent=1 // pred_region
      %232 = dma.done [#allocation3], 32
    $region29: #{tpu_custom_call.1} parent=1 // pred_fallthru
      _
    %233 = vsyncpa [#allocation3], 1

</llo_original>
